<compile_context>
chip_gen: v7x
topology: tpu7x:2x2x1
jax: 0.10.0
libtpu: 0.0.40
codegen_flags: <defaults>
</compile_context>

<pallas_src>
import functools
import math

import jax
import jax.numpy as jnp
from jax import lax
from jax.experimental import pallas as pl
from jax.experimental.pallas import tpu as pltpu


# ------------------------------ helpers -------------------------------------

def _pick_tile(n, candidates):
    """Largest candidate tile that divides n, else the full extent."""
    for c in candidates:
        if n % c == 0:
            return c
    return n


def _vmem_limit(per_step_bytes):
    """Scoped-VMEM hint: headroom for double-buffering, capped at v7x physical."""
    return int(min(max(3 * per_step_bytes + (8 << 20), 32 << 20), 64 << 20))


# ------------------------- kernel 1: QKV projection --------------------------

def _qkv_proj_kernel(x_ref, wq_ref, wk_ref, wv_ref, bq_ref, bk_ref, bv_ref,
                     q_ref, k_ref, v_ref, *, scale):
    x = x_ref[...]                                                  # [tm, D] bf16
    q = jnp.dot(x, wq_ref[...], preferred_element_type=jnp.float32) + bq_ref[...]
    k = jnp.dot(x, wk_ref[...], preferred_element_type=jnp.float32) + bk_ref[...]
    v = jnp.dot(x, wv_ref[...], preferred_element_type=jnp.float32) + bv_ref[...]
    # Fold 1/sqrt(head_dim) into q here (O(M*D) VPU work instead of O(T^2)).
    q_ref[...] = (q * scale).astype(q_ref.dtype)
    k_ref[...] = k.astype(k_ref.dtype)
    v_ref[...] = v.astype(v_ref.dtype)


# ----------------------- kernel 2: flash attention ---------------------------

def _flash_attn_body(q_ref, k_ref, v_ref, bias_f32, o_ref,
                     m_sc, l_sc, acc_sc, num_heads, head_dim):
    kv_idx = pl.program_id(2)

    @pl.when(kv_idx == 0)
    def _():
        m_sc[...] = jnp.full_like(m_sc, -jnp.inf)
        l_sc[...] = jnp.zeros_like(l_sc)
        acc_sc[...] = jnp.zeros_like(acc_sc)

    # Load each block once, slice per head in registers (static lane slices;
    # unmasked when head_dim is a multiple of 128).
    q_blk = q_ref[0]                                   # [tq,  D] bf16 (pre-scaled)
    k_blk = k_ref[0]                                   # [tkv, D] bf16
    v_blk = v_ref[0]                                   # [tkv, D] bf16

    # Static unroll over heads — fine for H <= 8.
    for h in range(num_heads):
        sl = slice(h * head_dim, (h + 1) * head_dim)
        q_h, k_h, v_h = q_blk[:, sl], k_blk[:, sl], v_blk[:, sl]

        # Q @ K^T contracting the last dims (no XLU transpose), f32 accumulate.
        s = lax.dot_general(q_h, k_h,
                            dimension_numbers=(((1,), (1,)), ((), ())),
                            preferred_element_type=jnp.float32)     # [tq, tkv]
        if bias_f32 is not None:
            s = s + bias_f32                            # additive soft mask

        # Online (flash) softmax update, all in f32.
        m_prev = m_sc[h]                                # [tq, 1]
        m_new = jnp.maximum(m_prev, jnp.max(s, axis=-1, keepdims=True))
        alpha = jnp.exp(m_prev - m_new)
        p = jnp.exp(s - m_new)
        l_sc[h] = alpha * l_sc[h] + jnp.sum(p, axis=-1, keepdims=True)
        acc_sc[h] = alpha * acc_sc[h] + jnp.dot(
            p.astype(jnp.bfloat16), v_h, preferred_element_type=jnp.float32)
        m_sc[h] = m_new

    @pl.when(kv_idx == pl.num_programs(2) - 1)
    def _():
        # Direct per-head stores into the lane-dense [tq, H*Dh] output block.
        for h in range(num_heads):
            inv_l = pl.reciprocal(l_sc[h], approx=True)       # EUP, not divide
            o_ref[0, :, h * head_dim:(h + 1) * head_dim] = (
                acc_sc[h] * inv_l).astype(o_ref.dtype)


def _flash_kernel_masked(q_ref, k_ref, v_ref, bias_ref, o_ref,
                         m_sc, l_sc, acc_sc, *, num_heads, head_dim):
    bias = bias_ref[0].astype(jnp.float32)            # [tq, tkv], hoisted
    _flash_attn_body(q_ref, k_ref, v_ref, bias, o_ref,
                     m_sc, l_sc, acc_sc, num_heads, head_dim)


def _flash_kernel_nomask(q_ref, k_ref, v_ref, o_ref,
                         m_sc, l_sc, acc_sc, *, num_heads, head_dim):
    _flash_attn_body(q_ref, k_ref, v_ref, None, o_ref,
                     m_sc, l_sc, acc_sc, num_heads, head_dim)


# ------------------------------ host wrapper --------------------------------

def mha_forward(x, w, b, num_heads, head_dim, mask=None):
    """Reproduces MHA.forward. x: [N, T, D], w: [D, 3D], b: [3D], mask: [N,1,T,T]."""
    B, T, D = x.shape
    assert D == num_heads * head_dim
    assert w.shape == (D, 3 * D) and b.shape == (3 * D,)

    # ---- one-time parameter prep (layout plumbing only) ----
    # De-interleave the fused [H, Dh, 3] column layout into per-tensor weights.
    w4 = w.reshape(D, num_heads, head_dim, 3)
    b3 = b.reshape(num_heads, head_dim, 3)
    wq = w4[..., 0].reshape(D, D).astype(jnp.bfloat16)
    wk = w4[..., 1].reshape(D, D).astype(jnp.bfloat16)
    wv = w4[..., 2].reshape(D, D).astype(jnp.bfloat16)
    bq = b3[..., 0].reshape(1, D).astype(jnp.float32)
    bk = b3[..., 1].reshape(1, D).astype(jnp.float32)
    bv = b3[..., 2].reshape(1, D).astype(jnp.float32)

    # ---------------- kernel 1: QKV projection ----------------
    M = B * T
    x2d = x.reshape(M, D).astype(jnp.bfloat16)        # bf16 x halves the DMA
    tm = _pick_tile(M, (512, 256, 128))               # >=256 rows when possible
    scale = 1.0 / math.sqrt(head_dim)

    proj_step_bytes = (tm * D * 2) + 3 * (D * D * 2) + 3 * (D * 4) + 3 * (tm * D * 2)
    # NOTE: weight index_map is constant across the grid, so blocks are not
    # re-DMA'd per row tile (only the extra pipeline buffer costs VMEM).
    qkv = pl.pallas_call(
        functools.partial(_qkv_proj_kernel, scale=scale),
        out_shape=tuple(jax.ShapeDtypeStruct((M, D), jnp.bfloat16) for _ in range(3)),
        grid_spec=pltpu.PrefetchScalarGridSpec(
            num_scalar_prefetch=0,
            grid=(M // tm,),
            in_specs=[
                pl.BlockSpec((tm, D), lambda i: (i, 0)),
                pl.BlockSpec((D, D), lambda i: (0, 0)),
                pl.BlockSpec((D, D), lambda i: (0, 0)),
                pl.BlockSpec((D, D), lambda i: (0, 0)),
                pl.BlockSpec((1, D), lambda i: (0, 0)),
                pl.BlockSpec((1, D), lambda i: (0, 0)),
                pl.BlockSpec((1, D), lambda i: (0, 0)),
            ],
            out_specs=[pl.BlockSpec((tm, D), lambda i: (i, 0))] * 3,
        ),
        compiler_params=pltpu.CompilerParams(
            dimension_semantics=("parallel",),
            vmem_limit_bytes=_vmem_limit(proj_step_bytes)),
    )(x2d, wq, wk, wv, bq, bk, bv)
    q3 = qkv[0].reshape(B, T, D)
    k3 = qkv[1].reshape(B, T, D)
    v3 = qkv[2].reshape(B, T, D)

    # ---------------- kernel 2: flash attention ----------------
    tq = _pick_tile(T, (256, 128))
    tkv = _pick_tile(T, (256, 128))

    q_spec = pl.BlockSpec((1, tq, D), lambda bi, qi, ki: (bi, qi, 0))
    kv_spec = pl.BlockSpec((1, tkv, D), lambda bi, qi, ki: (bi, ki, 0))
    out_spec = pl.BlockSpec((1, tq, D), lambda bi, qi, ki: (bi, qi, 0))

    scratch = [
        pltpu.VMEM((num_heads, tq, 1), jnp.float32),          # running max
        pltpu.VMEM((num_heads, tq, 1), jnp.float32),          # running denom
        pltpu.VMEM((num_heads, tq, head_dim), jnp.float32),   # output accum
    ]

    attn_step_bytes = (tq * D * 2) + 2 * (tkv * D * 2) + (tq * D * 4) \
        + num_heads * tq * (head_dim + 2 * 128) * 4

    if mask is None:
        kernel = functools.partial(_flash_kernel_nomask,
                                   num_heads=num_heads, head_dim=head_dim)
        in_specs = [q_spec, kv_spec, kv_spec]
        args = (q3, k3, v3)
    else:
        # Module semantics: logits += (1 - mask) * -1e4 (soft mask).
        # TODO(synk): for padding/causal masks, generate the bias in-kernel
        # from per-row lengths (scalar prefetch) and skip the T^2 DMA.
        bias = ((1.0 - mask.astype(jnp.float32)) * -10000.0)
        bias = bias.reshape(B, T, T).astype(jnp.bfloat16)     # bf16 halves traffic
        kernel = functools.partial(_flash_kernel_masked,
                                   num_heads=num_heads, head_dim=head_dim)
        in_specs = [q_spec, kv_spec, kv_spec,
                    pl.BlockSpec((1, tq, tkv), lambda bi, qi, ki: (bi, qi, ki))]
        args = (q3, k3, v3, bias)
        attn_step_bytes += tq * tkv * 2

    return pl.pallas_call(
        kernel,
        out_shape=jax.ShapeDtypeStruct((B, T, D), jnp.float32),
        grid_spec=pltpu.PrefetchScalarGridSpec(
            num_scalar_prefetch=0,
            grid=(B, T // tq, T // tkv),        # reduction (kv) axis last
            in_specs=in_specs,
            out_specs=out_spec,
            scratch_shapes=scratch),
        compiler_params=pltpu.CompilerParams(
            dimension_semantics=("parallel", "parallel", "arbitrary"),
            vmem_limit_bytes=_vmem_limit(attn_step_bytes)),
    )(*args)


# ----------------------- pure-JAX reference (f32) ---------------------------

def mha_reference(x, w, b, num_heads, head_dim, mask=None):
    B, T, D = x.shape
    qkv = x @ w + b
    qkv = qkv.reshape(B, T, num_heads, head_dim, 3)
    qkv = jnp.transpose(qkv, (4, 0, 2, 1, 3))
    q, k, v = qkv[0], qkv[1], qkv[2]
    logits = jnp.einsum("bhtd,bhsd->bhts", q, k) / math.sqrt(head_dim)
    if mask is not None:
        logits = logits + (1.0 - mask) * -10000.0
    wts = jax.nn.softmax(logits, axis=-1)
    out = jnp.einsum("bhts,bhsd->bhtd", wts, v)
    out = jnp.transpose(out, (0, 2, 1, 3)).reshape(B, T, num_heads * head_dim)
    return out


if __name__ == "__main__":
    num_heads, head_dim = 4, 8
    d_model = num_heads * head_dim          # 32
    B, T = 2, 8

    key = jax.random.PRNGKey(0)
    kx, kw, kb, km = jax.random.split(key, 4)

    x = jax.random.normal(kx, (B, T, d_model), dtype=jnp.float32)
    # deterministic "nn.Linear(d_model, 3*d_model)" params (synthetic init),
    # stored as [D, 3D] (transpose of torch's [3D, D]) so y = x @ W + b.
    bound = 1.0 / math.sqrt(d_model)
    w = jax.random.uniform(kw, (d_model, 3 * d_model), dtype=jnp.float32,
                           minval=-bound, maxval=bound)
    b = jax.random.uniform(kb, (3 * d_model,), dtype=jnp.float32,
                           minval=-bound, maxval=bound)
    # 0/1 validity mask of shape [N, 1, T, T]
    mask = (jax.random.uniform(km, (B, 1, T, T)) > 0.2).astype(jnp.float32)

    # Masked path
    out = jax.block_until_ready(mha_forward(x, w, b, num_heads, head_dim, mask))
    ref = mha_reference(x, w, b, num_heads, head_dim, mask)
    assert out.shape == (B, T, d_model)
    assert jnp.allclose(out, ref, atol=5e-2, rtol=5e-2), (
        float(jnp.max(jnp.abs(out - ref))))

    # No-mask path (separate kernel variant; no mask DMA at all)
    out_nm = jax.block_until_ready(mha_forward(x, w, b, num_heads, head_dim, None))
    ref_nm = mha_reference(x, w, b, num_heads, head_dim, None)
    assert jnp.allclose(out_nm, ref_nm, atol=5e-2, rtol=5e-2), (
        float(jnp.max(jnp.abs(out_nm - ref_nm))))

    print("KERNEL_OK")
</pallas_src>

<mosaic_0001>
module attributes {stable_mosaic.version = 11 : i64} {
  func.func @_qkv_proj_kernel(%arg0: i32, %arg1: memref<16x32xbf16, #tpu.memory_space<vmem>>, %arg2: memref<32x32xbf16, #tpu.memory_space<vmem>>, %arg3: memref<32x32xbf16, #tpu.memory_space<vmem>>, %arg4: memref<32x32xbf16, #tpu.memory_space<vmem>>, %arg5: memref<1x32xf32, #tpu.memory_space<vmem>>, %arg6: memref<1x32xf32, #tpu.memory_space<vmem>>, %arg7: memref<1x32xf32, #tpu.memory_space<vmem>>, %arg8: memref<16x32xbf16, #tpu.memory_space<vmem>>, %arg9: memref<16x32xbf16, #tpu.memory_space<vmem>>, %arg10: memref<16x32xbf16, #tpu.memory_space<vmem>>) attributes {dimension_semantics = [#tpu.dimension_semantics<parallel>], iteration_bounds = array<i64: 1>, scalar_prefetch = 0 : i64, scratch_operands = 0 : i64, tpu.core_type = #tpu.core_type<tc>, window_params = [{transform_indices = @transform_0, window_bounds = array<i64: 16, 32>}, {pipeline_mode = #tpu.pipeline_mode<synchronous>, transform_indices = @transform_1, window_bounds = array<i64: 32, 32>}, {pipeline_mode = #tpu.pipeline_mode<synchronous>, transform_indices = @transform_2, window_bounds = array<i64: 32, 32>}, {pipeline_mode = #tpu.pipeline_mode<synchronous>, transform_indices = @transform_3, window_bounds = array<i64: 32, 32>}, {pipeline_mode = #tpu.pipeline_mode<synchronous>, transform_indices = @transform_4, window_bounds = array<i64: 1, 32>}, {pipeline_mode = #tpu.pipeline_mode<synchronous>, transform_indices = @transform_5, window_bounds = array<i64: 1, 32>}, {pipeline_mode = #tpu.pipeline_mode<synchronous>, transform_indices = @transform_6, window_bounds = array<i64: 1, 32>}, {transform_indices = @transform_7, window_bounds = array<i64: 16, 32>}, {transform_indices = @transform_8, window_bounds = array<i64: 16, 32>}, {transform_indices = @transform_9, window_bounds = array<i64: 16, 32>}]} {
    %c0 = arith.constant 0 : index
    %c0_0 = arith.constant 0 : index
    %0 = vector.load %arg1[%c0, %c0_0] : memref<16x32xbf16, #tpu.memory_space<vmem>>, vector<16x32xbf16>
    %c0_1 = arith.constant 0 : index
    %c0_2 = arith.constant 0 : index
    %1 = vector.load %arg2[%c0_1, %c0_2] : memref<32x32xbf16, #tpu.memory_space<vmem>>, vector<32x32xbf16>
    %cst = arith.constant dense<0.000000e+00> : vector<16x32xf32>
    %2 = tpu.matmul %0, %1, %cst {dimension_numbers = #tpu.dot_dimension_numbers<[1], [0], [0], [1], [0, 0, 1, 1], [], []>} : vector<16x32xbf16>, vector<32x32xbf16>, vector<16x32xf32> -> vector<16x32xf32>
    %c0_3 = arith.constant 0 : index
    %c0_4 = arith.constant 0 : index
    %3 = vector.load %arg5[%c0_3, %c0_4] : memref<1x32xf32, #tpu.memory_space<vmem>>, vector<1x32xf32>
    %4 = vector.broadcast %3 : vector<1x32xf32> to vector<16x32xf32>
    %5 = arith.addf %2, %4 : vector<16x32xf32>
    %c0_5 = arith.constant 0 : index
    %c0_6 = arith.constant 0 : index
    %6 = vector.load %arg3[%c0_5, %c0_6] : memref<32x32xbf16, #tpu.memory_space<vmem>>, vector<32x32xbf16>
    %cst_7 = arith.constant dense<0.000000e+00> : vector<16x32xf32>
    %7 = tpu.matmul %0, %6, %cst_7 {dimension_numbers = #tpu.dot_dimension_numbers<[1], [0], [0], [1], [0, 0, 1, 1], [], []>} : vector<16x32xbf16>, vector<32x32xbf16>, vector<16x32xf32> -> vector<16x32xf32>
    %c0_8 = arith.constant 0 : index
    %c0_9 = arith.constant 0 : index
    %8 = vector.load %arg6[%c0_8, %c0_9] : memref<1x32xf32, #tpu.memory_space<vmem>>, vector<1x32xf32>
    %9 = vector.broadcast %8 : vector<1x32xf32> to vector<16x32xf32>
    %10 = arith.addf %7, %9 : vector<16x32xf32>
    %c0_10 = arith.constant 0 : index
    %c0_11 = arith.constant 0 : index
    %11 = vector.load %arg4[%c0_10, %c0_11] : memref<32x32xbf16, #tpu.memory_space<vmem>>, vector<32x32xbf16>
    %cst_12 = arith.constant dense<0.000000e+00> : vector<16x32xf32>
    %12 = tpu.matmul %0, %11, %cst_12 {dimension_numbers = #tpu.dot_dimension_numbers<[1], [0], [0], [1], [0, 0, 1, 1], [], []>} : vector<16x32xbf16>, vector<32x32xbf16>, vector<16x32xf32> -> vector<16x32xf32>
    %c0_13 = arith.constant 0 : index
    %c0_14 = arith.constant 0 : index
    %13 = vector.load %arg7[%c0_13, %c0_14] : memref<1x32xf32, #tpu.memory_space<vmem>>, vector<1x32xf32>
    %14 = vector.broadcast %13 : vector<1x32xf32> to vector<16x32xf32>
    %15 = arith.addf %12, %14 : vector<16x32xf32>
    %cst_15 = arith.constant 0.353553385 : f32
    %16 = vector.broadcast %cst_15 : f32 to vector<16x32xf32>
    %17 = arith.mulf %5, %16 : vector<16x32xf32>
    %18 = arith.truncf %17 : vector<16x32xf32> to vector<16x32xbf16>
    %c0_16 = arith.constant 0 : index
    %c0_17 = arith.constant 0 : index
    %19 = vector.load %arg8[%c0_16, %c0_17] : memref<16x32xbf16, #tpu.memory_space<vmem>>, vector<16x32xbf16>
    tpu.vector_store %arg8[%c0_16, %c0_17], %18 {strides = array<i32>} : memref<16x32xbf16, #tpu.memory_space<vmem>>, vector<16x32xbf16>,
    %20 = arith.truncf %10 : vector<16x32xf32> to vector<16x32xbf16>
    %c0_18 = arith.constant 0 : index
    %c0_19 = arith.constant 0 : index
    %21 = vector.load %arg9[%c0_18, %c0_19] : memref<16x32xbf16, #tpu.memory_space<vmem>>, vector<16x32xbf16>
    tpu.vector_store %arg9[%c0_18, %c0_19], %20 {strides = array<i32>} : memref<16x32xbf16, #tpu.memory_space<vmem>>, vector<16x32xbf16>,
    %22 = arith.truncf %15 : vector<16x32xf32> to vector<16x32xbf16>
    %c0_20 = arith.constant 0 : index
    %c0_21 = arith.constant 0 : index
    %23 = vector.load %arg10[%c0_20, %c0_21] : memref<16x32xbf16, #tpu.memory_space<vmem>>, vector<16x32xbf16>
    tpu.vector_store %arg10[%c0_20, %c0_21], %22 {strides = array<i32>} : memref<16x32xbf16, #tpu.memory_space<vmem>>, vector<16x32xbf16>,
    return
  }
  func.func @transform_0(%arg0: i32) -> (i32, i32) {
    %c0_i32 = arith.constant 0 : i32
    %c0_i32_0 = arith.constant 0 : i32
    return %arg0, %c0_i32 : i32, i32
  }
  func.func @transform_1(%arg0: i32) -> (i32, i32) {
    %c0_i32 = arith.constant 0 : i32
    %c0_i32_0 = arith.constant 0 : i32
    %c0_i32_1 = arith.constant 0 : i32
    return %c0_i32, %c0_i32_0 : i32, i32
  }
  func.func @transform_2(%arg0: i32) -> (i32, i32) {
    %c0_i32 = arith.constant 0 : i32
    %c0_i32_0 = arith.constant 0 : i32
    %c0_i32_1 = arith.constant 0 : i32
    return %c0_i32, %c0_i32_0 : i32, i32
  }
  func.func @transform_3(%arg0: i32) -> (i32, i32) {
    %c0_i32 = arith.constant 0 : i32
    %c0_i32_0 = arith.constant 0 : i32
    %c0_i32_1 = arith.constant 0 : i32
    return %c0_i32, %c0_i32_0 : i32, i32
  }
  func.func @transform_4(%arg0: i32) -> (i32, i32) {
    %c0_i32 = arith.constant 0 : i32
    %c0_i32_0 = arith.constant 0 : i32
    %c0_i32_1 = arith.constant 0 : i32
    return %c0_i32, %c0_i32_0 : i32, i32
  }
  func.func @transform_5(%arg0: i32) -> (i32, i32) {
    %c0_i32 = arith.constant 0 : i32
    %c0_i32_0 = arith.constant 0 : i32
    %c0_i32_1 = arith.constant 0 : i32
    return %c0_i32, %c0_i32_0 : i32, i32
  }
  func.func @transform_6(%arg0: i32) -> (i32, i32) {
    %c0_i32 = arith.constant 0 : i32
    %c0_i32_0 = arith.constant 0 : i32
    %c0_i32_1 = arith.constant 0 : i32
    return %c0_i32, %c0_i32_0 : i32, i32
  }
  func.func @transform_7(%arg0: i32) -> (i32, i32) {
    %c0_i32 = arith.constant 0 : i32
    %c0_i32_0 = arith.constant 0 : i32
    return %arg0, %c0_i32 : i32, i32
  }
  func.func @transform_8(%arg0: i32) -> (i32, i32) {
    %c0_i32 = arith.constant 0 : i32
    %c0_i32_0 = arith.constant 0 : i32
    return %arg0, %c0_i32 : i32, i32
  }
  func.func @transform_9(%arg0: i32) -> (i32, i32) {
    %c0_i32 = arith.constant 0 : i32
    %c0_i32_0 = arith.constant 0 : i32
    return %arg0, %c0_i32 : i32, i32
  }
}

</mosaic_0001>

<llo_original>
// kernel: tpu_custom_call.1
$region0: #{tpu_custom_call.1}
  #allocation0 [shape = 'u32[]', space=smem, size = 0x4, offset = 0x4, fixed_abs, tag = 'smem constant byte address 0x4 - core index']
  #allocation1 [shape = 'u32[144,128]{1,0:T(1,128)}', space=vmem, size = 0x12000, scoped, tag = 'internal scratch']
  %s0 = inlined_call_operand.hbm [shape: bf16[16,32], index: 0, kind: input, shape index: {}]
  %s1 = inlined_call_operand.hbm [shape: bf16[32,32], index: 1, kind: input, shape index: {}]
  %s2 = inlined_call_operand.hbm [shape: bf16[32,32], index: 2, kind: input, shape index: {}]
  %s3 = inlined_call_operand.hbm [shape: bf16[32,32], index: 3, kind: input, shape index: {}]
  %s4 = inlined_call_operand.vmem [shape: f32[1,32], index: 4, kind: input, shape index: {}]
  %s5 = inlined_call_operand.vmem [shape: f32[1,32], index: 5, kind: input, shape index: {}]
  %s6 = inlined_call_operand.vmem [shape: f32[1,32], index: 6, kind: input, shape index: {}]
  %s7 = inlined_call_operand.hbm [shape: bf16[16,32], index: 7, kind: output, shape index: {0}]
  %s8 = inlined_call_operand.hbm [shape: bf16[16,32], index: 8, kind: output, shape index: {1}]
  %s9 = inlined_call_operand.hbm [shape: bf16[16,32], index: 9, kind: output, shape index: {2}]
  %10 = xla_tuple %s7, %s8, %s9
  %s11 = sld [smem:[#allocation0]]
  $region70: #{tpu_custom_call.1} parent=0
    _
  %s13 = ssub.s32 1, %s11
  %s14 = scalar_select 0, %s13, %s11
  $region1: #{tpu_custom_call.1} parent=0
    #allocation2 [shape = 'u8[4096]{0}', space=vmem, size = 0x1000, scoped, tag = 'input window, operand 0, single buffered']
    #allocation3 [shape = 's32[1]{0}', space=sflag, size = 0x4, scoped, tag = 'scoped memory for tpu_custom_call.1']
    #allocation4 [shape = 's32[1]{0}', space=sflag, size = 0x4, scoped, tag = 'scoped memory for tpu_custom_call.1']
    #allocation5 [shape = 'u8[8192]{0}', space=vmem, size = 0x2000, scoped, tag = 'input window, operand 1, single buffered']
    #allocation6 [shape = 's32[1]{0}', space=sflag, size = 0x4, scoped, tag = 'scoped memory for tpu_custom_call.1']
    #allocation7 [shape = 'u8[8192]{0}', space=vmem, size = 0x2000, scoped, tag = 'input window, operand 2, single buffered']
    #allocation8 [shape = 'u8[8192]{0}', space=vmem, size = 0x2000, scoped, tag = 'input window, operand 3, single buffered']
    #allocation9 [shape = 's32[1]{0}', space=sflag, size = 0x4, scoped, tag = 'scoped memory for tpu_custom_call.1']
    #allocation10 [shape = 'u8[4096]{0}', space=vmem, size = 0x1000, scoped, tag = 'output window, operand 0, single buffered']
    #allocation11 [shape = 'u8[4096]{0}', space=vmem, size = 0x1000, scoped, tag = 'output window, operand 1, single buffered']
    #allocation12 [shape = 's32[1]{0}', space=sflag, size = 0x4, scoped, tag = 'scoped memory for tpu_custom_call.1']
    #allocation13 [shape = 'u8[4096]{0}', space=vmem, size = 0x1000, scoped, tag = 'output window, operand 2, single buffered']
    %15 = vsyncpa [#allocation3], 0
    %16 = vsyncpa [#allocation6], 0
    %17 = vsyncpa [#allocation9], 0
    %18 = vsyncpa [#allocation4], 0
    %19 = vsyncpa [#allocation12], 0
    // Predicated region
    $region2: #{tpu_custom_call.1} parent=1 // pred_check
      _
    $region3: #{tpu_custom_call.1} parent=1 // pred_check_branch
      %21 = sbr.rel (0) target = $region5
    $region4: #{tpu_custom_call.1} parent=1 // pred_region
      %s23 = ssub.s32 128, 128
      %24 = vsyncadd [#allocation3], %s23
      %s25 = sshll.u32 [#allocation2], 4
      %s26 = int_to_ptr.vmem [resolvable:$true] %s25
      %31 = dma.hbm_to_vmem [thread:$0]  %s0, 128, %s26, [#allocation3], 64, 64, 4
    $region5: #{tpu_custom_call.1} parent=1 // pred_fallthru
      _
    // Predicated region
    $region6: #{tpu_custom_call.1} parent=1 // pred_check
      _
    $region7: #{tpu_custom_call.1} parent=1 // pred_check_branch
      %33 = sbr.rel (0) target = $region9
    $region8: #{tpu_custom_call.1} parent=1 // pred_region
      %s35 = ssub.s32 256, 256
      %36 = vsyncadd [#allocation6], %s35
      %s37 = sshll.u32 [#allocation5], 4
      %s38 = int_to_ptr.vmem [resolvable:$true] %s37
      %43 = dma.hbm_to_vmem [thread:$0]  %s1, 256, %s38, [#allocation6], 64, 64, 4
    $region9: #{tpu_custom_call.1} parent=1 // pred_fallthru
      _
    // Predicated region
    $region10: #{tpu_custom_call.1} parent=1 // pred_check
      _
    $region11: #{tpu_custom_call.1} parent=1 // pred_check_branch
      %45 = sbr.rel (0) target = $region13
    $region12: #{tpu_custom_call.1} parent=1 // pred_region
      %s47 = ssub.s32 256, 256
      %48 = vsyncadd [#allocation6], %s47
      %s49 = sshll.u32 [#allocation7], 4
      %s50 = int_to_ptr.vmem [resolvable:$true] %s49
      %55 = dma.hbm_to_vmem [thread:$0]  %s2, 256, %s50, [#allocation6], 64, 64, 4
    $region13: #{tpu_custom_call.1} parent=1 // pred_fallthru
      _
    // Predicated region
    $region14: #{tpu_custom_call.1} parent=1 // pred_check
      _
    $region15: #{tpu_custom_call.1} parent=1 // pred_check_branch
      %57 = sbr.rel (0) target = $region17
    $region16: #{tpu_custom_call.1} parent=1 // pred_region
      %s59 = ssub.s32 256, 256
      %60 = vsyncadd [#allocation9], %s59
      %s61 = sshll.u32 [#allocation8], 4
      %s62 = int_to_ptr.vmem [resolvable:$true] %s61
      %67 = dma.hbm_to_vmem [thread:$0]  %s3, 256, %s62, [#allocation9], 64, 64, 4
    $region17: #{tpu_custom_call.1} parent=1 // pred_fallthru
      _
    // Predicated region
    $region18: #{tpu_custom_call.1} parent=1 // pred_check
      _
    $region19: #{tpu_custom_call.1} parent=1 // pred_check_branch
      %69 = sbr.rel (0) target = $region21
    $region20: #{tpu_custom_call.1} parent=1 // pred_region
      _
    $region21: #{tpu_custom_call.1} parent=1 // pred_fallthru
      _
    // Predicated region
    $region22: #{tpu_custom_call.1} parent=1 // pred_check
      _
    $region23: #{tpu_custom_call.1} parent=1 // pred_check_branch
      %71 = sbr.rel (0) target = $region25
    $region24: #{tpu_custom_call.1} parent=1 // pred_region
      _
    $region25: #{tpu_custom_call.1} parent=1 // pred_fallthru
      _
    // Predicated region
    $region26: #{tpu_custom_call.1} parent=1 // pred_check
      _
    $region27: #{tpu_custom_call.1} parent=1 // pred_check_branch
      %73 = sbr.rel (0) target = $region29
    $region28: #{tpu_custom_call.1} parent=1 // pred_region
      _
    $region29: #{tpu_custom_call.1} parent=1 // pred_fallthru
      _
    // Predicated region
    $region30: #{tpu_custom_call.1} parent=1 // pred_check
      _
    $region31: #{tpu_custom_call.1} parent=1 // pred_check_branch
      %75 = sbr.rel (0) target = $region33
    $region32: #{tpu_custom_call.1} parent=1 // pred_region
      %76 = dma.done [#allocation3], 128
    $region33: #{tpu_custom_call.1} parent=1 // pred_fallthru
      _
    // Predicated region
    $region34: #{tpu_custom_call.1} parent=1 // pred_check
      _
    $region35: #{tpu_custom_call.1} parent=1 // pred_check_branch
      %78 = sbr.rel (0) target = $region37
    $region36: #{tpu_custom_call.1} parent=1 // pred_region
      %79 = dma.done [#allocation6], 256
    $region37: #{tpu_custom_call.1} parent=1 // pred_fallthru
      _
    // Predicated region
    $region38: #{tpu_custom_call.1} parent=1 // pred_check
      _
    $region39: #{tpu_custom_call.1} parent=1 // pred_check_branch
      %81 = sbr.rel (0) target = $region41
    $region40: #{tpu_custom_call.1} parent=1 // pred_region
      %82 = dma.done [#allocation6], 256
    $region41: #{tpu_custom_call.1} parent=1 // pred_fallthru
      _
    // Predicated region
    $region42: #{tpu_custom_call.1} parent=1 // pred_check
      _
    $region43: #{tpu_custom_call.1} parent=1 // pred_check_branch
      %84 = sbr.rel (0) target = $region45
    $region44: #{tpu_custom_call.1} parent=1 // pred_region
      %85 = dma.done [#allocation9], 256
    $region45: #{tpu_custom_call.1} parent=1 // pred_fallthru
      _
    %v87 = vld [vmem:[#allocation2] sm:$0xf]
    %v88 = vld [vmem:[#allocation2 + $0x4] sm:$0xf]
    %v89 = vld [vmem:[#allocation5] sm:$0xf]
    %v90 = vld [vmem:[#allocation5 + $0x4] sm:$0xf]
    %v91 = vld [vmem:[#allocation5 + $0x8] sm:$0xf]
    %v92 = vld [vmem:[#allocation5 + $0xc] sm:$0xf]
    %v93 = vld [vmem:[%s4] sm:$0x1]
    %v95 = vlaneseq
    %v96 = vshrl.u32 %v95, 7
    %v97 = vsub.s32 0, %v96
    %v98 = vrot.slane %v93, %v97
    %v102 = vunpack.c.l.b16 %v87
    %v103 = vunpack.c.l.b16 %v88
    %v104 = vpack.c.b16 %v103, %v102
    %v109 = vunpack.c.l.b16 %v89
    %v110 = vunpack.c.l.b16 %v90
    %v111 = vunpack.c.l.b16 %v91
    %v112 = vunpack.c.l.b16 %v92
    %v113 = vpack.c.b16 %v110, %v109
    %v114 = vpack.c.b16 %v112, %v111
    %vm117 = vcmask 261120
    %v119 = vsel %vm117, %v104, 0
    %121 = vmatprep.subr.bf16.mxu0 0
    %122 = vmatpush1.bf16.msra.mxu0 %v113
    %123 = vmatprep.subr.bf16.mxu0 0
    %124 = vmatpush1.bf16.msra.mxu0 %v114
    %125 = vmatprep.subr.bf16.mxu0 0
    %126 = vmatpush1.bf16.msra.mxu0 0
    %127 = vmatprep.subr.bf16.mxu0 0
    %128 = vmatpush1.bf16.msra.mxu0 0
    %129 = vmatprep.subr.bf16.mxu0 0
    %130 = vmatpush1.bf16.msra.mxu0 0
    %131 = vmatprep.subr.bf16.mxu0 0
    %132 = vmatpush1.bf16.msra.mxu0 0
    %133 = vmatprep.subr.bf16.mxu0 0
    %134 = vmatpush1.bf16.msra.mxu0 0
    %135 = vmatprep.subr.bf16.mxu0 0
    %136 = vmatpush1.bf16.msra.mxu0 0
    %137 = vmatprep.subr.bf16.mxu0 0
    %138 = vmatpush1.bf16.msra.mxu0 0
    %139 = vmatprep.subr.bf16.mxu0 0
    %140 = vmatpush1.bf16.msra.mxu0 0
    %141 = vmatprep.subr.bf16.mxu0 0
    %142 = vmatpush1.bf16.msra.mxu0 0
    %143 = vmatprep.subr.bf16.mxu0 0
    %144 = vmatpush1.bf16.msra.mxu0 0
    %145 = vmatprep.subr.bf16.mxu0 0
    %146 = vmatpush1.bf16.msra.mxu0 0
    %147 = vmatprep.subr.bf16.mxu0 0
    %148 = vmatpush1.bf16.msra.mxu0 0
    %149 = vmatprep.subr.bf16.mxu0 0
    %150 = vmatpush1.bf16.msra.mxu0 0
    %151 = vmatprep.subr.bf16.mxu0 0
    %152 = vmatpush1.bf16.msra.mxu0 0
    %153 = vmatprep.mubr.bf16.mxu0 0
    %154 = vmatmul.mubr.bf16.gmra.mrb[0].mxu0 %v119
    %v155 = vpop.f32.mrb[0].mxu0
    %v156 = vadd.f32 %v98, %v155
    %v157 = vpop.f32.mrb[0].mxu0
    %v158 = vpop.f32.mrb[0].mxu0
    %v159 = vadd.f32 %v98, %v158
    %v160 = vpop.f32.mrb[0].mxu0
    %161 = vdwg.mxu0
    %v162 = vld [vmem:[#allocation7] sm:$0xf]
    %v163 = vld [vmem:[#allocation7 + $0x4] sm:$0xf]
    %v164 = vld [vmem:[#allocation7 + $0x8] sm:$0xf]
    %v165 = vld [vmem:[#allocation7 + $0xc] sm:$0xf]
    %v166 = vld [vmem:[%s5] sm:$0x1]
    %v168 = vlaneseq
    %v169 = vshrl.u32 %v168, 7
    %v170 = vsub.s32 0, %v169
    %v171 = vrot.slane %v166, %v170
    %v177 = vunpack.c.l.b16 %v162
    %v178 = vunpack.c.l.b16 %v163
    %v179 = vunpack.c.l.b16 %v164
    %v180 = vunpack.c.l.b16 %v165
    %v181 = vpack.c.b16 %v178, %v177
    %v182 = vpack.c.b16 %v180, %v179
    %185 = vmatprep.subr.bf16.mxu0 0
    %186 = vmatpush1.bf16.msra.mxu0 %v181
    %187 = vmatprep.subr.bf16.mxu0 0
    %188 = vmatpush1.bf16.msra.mxu0 %v182
    %189 = vmatprep.subr.bf16.mxu0 0
    %190 = vmatpush1.bf16.msra.mxu0 0
    %191 = vmatprep.subr.bf16.mxu0 0
    %192 = vmatpush1.bf16.msra.mxu0 0
    %193 = vmatprep.subr.bf16.mxu0 0
    %194 = vmatpush1.bf16.msra.mxu0 0
    %195 = vmatprep.subr.bf16.mxu0 0
    %196 = vmatpush1.bf16.msra.mxu0 0
    %197 = vmatprep.subr.bf16.mxu0 0
    %198 = vmatpush1.bf16.msra.mxu0 0
    %199 = vmatprep.subr.bf16.mxu0 0
    %200 = vmatpush1.bf16.msra.mxu0 0
    %201 = vmatprep.subr.bf16.mxu0 0
    %202 = vmatpush1.bf16.msra.mxu0 0
    %203 = vmatprep.subr.bf16.mxu0 0
    %204 = vmatpush1.bf16.msra.mxu0 0
    %205 = vmatprep.subr.bf16.mxu0 0
    %206 = vmatpush1.bf16.msra.mxu0 0
    %207 = vmatprep.subr.bf16.mxu0 0
    %208 = vmatpush1.bf16.msra.mxu0 0
    %209 = vmatprep.subr.bf16.mxu0 0
    %210 = vmatpush1.bf16.msra.mxu0 0
    %211 = vmatprep.subr.bf16.mxu0 0
    %212 = vmatpush1.bf16.msra.mxu0 0
    %213 = vmatprep.subr.bf16.mxu0 0
    %214 = vmatpush1.bf16.msra.mxu0 0
    %215 = vmatprep.subr.bf16.mxu0 0
    %216 = vmatpush1.bf16.msra.mxu0 0
    %217 = vmatprep.mubr.bf16.mxu0 0
    %218 = vmatmul.mubr.bf16.gmra.mrb[0].mxu0 %v119
    %v219 = vpop.f32.mrb[0].mxu0
    %v220 = vadd.f32 %v171, %v219
    %v221 = vpop.f32.mrb[0].mxu0
    %v222 = vpop.f32.mrb[0].mxu0
    %v223 = vadd.f32 %v171, %v222
    %v224 = vpop.f32.mrb[0].mxu0
    %225 = vdwg.mxu0
    %v226 = vld [vmem:[#allocation8] sm:$0xf]
    %v227 = vld [vmem:[#allocation8 + $0x4] sm:$0xf]
    %v228 = vld [vmem:[#allocation8 + $0x8] sm:$0xf]
    %v229 = vld [vmem:[#allocation8 + $0xc] sm:$0xf]
    %v230 = vld [vmem:[%s6] sm:$0x1]
    %v232 = vlaneseq
    %v233 = vshrl.u32 %v232, 7
    %v234 = vsub.s32 0, %v233
    %v235 = vrot.slane %v230, %v234
    %v241 = vunpack.c.l.b16 %v226
    %v242 = vunpack.c.l.b16 %v227
    %v243 = vunpack.c.l.b16 %v228
    %v244 = vunpack.c.l.b16 %v229
    %v245 = vpack.c.b16 %v242, %v241
    %v246 = vpack.c.b16 %v244, %v243
    %249 = vmatprep.subr.bf16.mxu0 0
    %250 = vmatpush1.bf16.msra.mxu0 %v245
    %251 = vmatprep.subr.bf16.mxu0 0
    %252 = vmatpush1.bf16.msra.mxu0 %v246
    %253 = vmatprep.subr.bf16.mxu0 0
    %254 = vmatpush1.bf16.msra.mxu0 0
    %255 = vmatprep.subr.bf16.mxu0 0
    %256 = vmatpush1.bf16.msra.mxu0 0
    %257 = vmatprep.subr.bf16.mxu0 0
    %258 = vmatpush1.bf16.msra.mxu0 0
    %259 = vmatprep.subr.bf16.mxu0 0
    %260 = vmatpush1.bf16.msra.mxu0 0
    %261 = vmatprep.subr.bf16.mxu0 0
    %262 = vmatpush1.bf16.msra.mxu0 0
    %263 = vmatprep.subr.bf16.mxu0 0
    %264 = vmatpush1.bf16.msra.mxu0 0
    %265 = vmatprep.subr.bf16.mxu0 0
    %266 = vmatpush1.bf16.msra.mxu0 0
    %267 = vmatprep.subr.bf16.mxu0 0
    %268 = vmatpush1.bf16.msra.mxu0 0
    %269 = vmatprep.subr.bf16.mxu0 0
    %270 = vmatpush1.bf16.msra.mxu0 0
    %271 = vmatprep.subr.bf16.mxu0 0
    %272 = vmatpush1.bf16.msra.mxu0 0
    %273 = vmatprep.subr.bf16.mxu0 0
    %274 = vmatpush1.bf16.msra.mxu0 0
    %275 = vmatprep.subr.bf16.mxu0 0
    %276 = vmatpush1.bf16.msra.mxu0 0
    %277 = vmatprep.subr.bf16.mxu0 0
    %278 = vmatpush1.bf16.msra.mxu0 0
    %279 = vmatprep.subr.bf16.mxu0 0
    %280 = vmatpush1.bf16.msra.mxu0 0
    %281 = vmatprep.mubr.bf16.mxu0 0
    %282 = vmatmul.mubr.bf16.gmra.mrb[0].mxu0 %v119
    %v283 = vpop.f32.mrb[0].mxu0
    %v284 = vadd.f32 %v235, %v283
    %v285 = vpop.f32.mrb[0].mxu0
    %v286 = vpop.f32.mrb[0].mxu0
    %v287 = vadd.f32 %v235, %v286
    %v288 = vpop.f32.mrb[0].mxu0
    %289 = vdwg.mxu0
    %v290 = vmul.f32 %v156, 0.35355338
    %v291 = vmul.f32 %v159, 0.35355338
    %v292 = vpack.c.bf16 %v291, %v290
    %v294 = vunpack.c.l.b16 %v292
    %v295 = vunpack.c.h.b16 %v292
    %v296 = vpack.c.b16 %v294, %v294
    %v297 = vpack.c.b16 %v295, %v295
    %vm300 = vcmask 257024
    %301 = vst.msk [vmem:[#allocation10] sm:$0xf] %vm300, %v296
    %302 = vst.msk [vmem:[#allocation10 + $0x4] sm:$0xf] %vm300, %v297
    %v303 = vpack.c.bf16 %v223, %v220
    %v305 = vunpack.c.l.b16 %v303
    %v306 = vunpack.c.h.b16 %v303
    %v307 = vpack.c.b16 %v305, %v305
    %v308 = vpack.c.b16 %v306, %v306
    %311 = vst.msk [vmem:[#allocation11] sm:$0xf] %vm300, %v307
    %312 = vst.msk [vmem:[#allocation11 + $0x4] sm:$0xf] %vm300, %v308
    %v313 = vpack.c.bf16 %v287, %v284
    %v315 = vunpack.c.l.b16 %v313
    %v316 = vunpack.c.h.b16 %v313
    %v317 = vpack.c.b16 %v315, %v315
    %v318 = vpack.c.b16 %v316, %v316
    %321 = vst.msk [vmem:[#allocation13] sm:$0xf] %vm300, %v317
    %322 = vst.msk [vmem:[#allocation13 + $0x4] sm:$0xf] %vm300, %v318
    // Predicated region
    $region46: #{tpu_custom_call.1} parent=1 // pred_check
      _
    $region47: #{tpu_custom_call.1} parent=1 // pred_check_branch
      %324 = sbr.rel (0) target = $region49
    $region48: #{tpu_custom_call.1} parent=1 // pred_region
      %s326 = ssub.s32 128, 128
      %327 = vsyncadd [#allocation4], %s326
      %s328 = sshll.u32 [#allocation10], 4
      %s329 = int_to_ptr.vmem [resolvable:$true] %s328
      %334 = dma.vmem_to_hbm [thread:$0]  %s329, 128, %s7, [#allocation4], 64, 64, 4
    $region49: #{tpu_custom_call.1} parent=1 // pred_fallthru
      _
    // Predicated region
    $region50: #{tpu_custom_call.1} parent=1 // pred_check
      _
    $region51: #{tpu_custom_call.1} parent=1 // pred_check_branch
      %336 = sbr.rel (0) target = $region53
    $region52: #{tpu_custom_call.1} parent=1 // pred_region
      %s338 = ssub.s32 128, 128
      %339 = vsyncadd [#allocation12], %s338
      %s340 = sshll.u32 [#allocation11], 4
      %s341 = int_to_ptr.vmem [resolvable:$true] %s340
      %346 = dma.vmem_to_hbm [thread:$0]  %s341, 128, %s8, [#allocation12], 64, 64, 4
    $region53: #{tpu_custom_call.1} parent=1 // pred_fallthru
      _
    // Predicated region
    $region54: #{tpu_custom_call.1} parent=1 // pred_check
      _
    $region55: #{tpu_custom_call.1} parent=1 // pred_check_branch
      %348 = sbr.rel (0) target = $region57
    $region56: #{tpu_custom_call.1} parent=1 // pred_region
      %s350 = ssub.s32 128, 128
      %351 = vsyncadd [#allocation12], %s350
      %s352 = sshll.u32 [#allocation13], 4
      %s353 = int_to_ptr.vmem [resolvable:$true] %s352
      %358 = dma.vmem_to_hbm [thread:$0]  %s353, 128, %s9, [#allocation12], 64, 64, 4
    $region57: #{tpu_custom_call.1} parent=1 // pred_fallthru
      _
    // Predicated region
    $region58: #{tpu_custom_call.1} parent=1 // pred_check
      _
    $region59: #{tpu_custom_call.1} parent=1 // pred_check_branch
      %360 = sbr.rel (0) target = $region61
    $region60: #{tpu_custom_call.1} parent=1 // pred_region
      %361 = dma.done [#allocation4], 128
    $region61: #{tpu_custom_call.1} parent=1 // pred_fallthru
      _
    // Predicated region
    $region62: #{tpu_custom_call.1} parent=1 // pred_check
      _
    $region63: #{tpu_custom_call.1} parent=1 // pred_check_branch
      %363 = sbr.rel (0) target = $region65
    $region64: #{tpu_custom_call.1} parent=1 // pred_region
      %364 = dma.done [#allocation12], 128
    $region65: #{tpu_custom_call.1} parent=1 // pred_fallthru
      _
    // Predicated region
    $region66: #{tpu_custom_call.1} parent=1 // pred_check
      _
    $region67: #{tpu_custom_call.1} parent=1 // pred_check_branch
      %366 = sbr.rel (0) target = $region69
    $region68: #{tpu_custom_call.1} parent=1 // pred_region
      %367 = dma.done [#allocation12], 128
    $region69: #{tpu_custom_call.1} parent=1 // pred_fallthru
      _
    %368 = vsyncpa [#allocation3], 1
    %369 = vsyncpa [#allocation6], 1
    %370 = vsyncpa [#allocation9], 1
    %371 = vsyncpa [#allocation4], 1
    %372 = vsyncpa [#allocation12], 1

</llo_original>
